<compile_context>
chip_gen: v7x
topology: tpu7x:2x2x1
jax: 0.10.0
libtpu: 0.0.40
codegen_flags: <defaults>
</compile_context>

<pallas_src>
import jax
import jax.numpy as jnp
from jax.experimental import pallas as pl
from jax.experimental.pallas import tpu as pltpu


def _round_up(x, m):
    return (x + m - 1) // m * m


def critic_head_kernel(x_t_ref, w1_t_ref, b1_t_ref, w2_ref, b2_ref, o_ref):
    # First linear layer, transposed orientation:
    #   h^T = relu(W1^T @ x^T + b1^T)          -> (HID, TB), batch along lanes.
    h = jnp.dot(w1_t_ref[...], x_t_ref[...], preferred_element_type=jnp.float32)
    h = jnp.maximum(h + b1_t_ref[...], 0.0)
    # Second (out_features=1) layer as VPU mul + sublane (XLU) reduce; result
    # is already lane-dense (1, TB) -- no degenerate N=1 MXU matmul.
    z = jnp.sum(h * w2_ref[...], axis=0, keepdims=True) + b2_ref[0, 0]
    # Sigmoid: EUP exp + EUP approximate reciprocal.
    o_ref[...] = pl.reciprocal(1.0 + jnp.exp(-z), approx=True)


def critic_head(pooled, w1, b1, w2, b2, *, block_b=1024):
    """sigmoid(relu(pooled @ w1 + b1) @ w2 + b2) as one Pallas TPU kernel."""
    B, H = pooled.shape
    HID = w1.shape[1]

    # Batch tile: multiple of 128 lanes, capped at block_b.  VMEM budget per
    # tile (double-buffered bf16 [H, TB]) = 2*H*TB*2 bytes, fine on all gens.
    tb = min(block_b, _round_up(B, 128))
    b_pad = _round_up(B, tb)
    nb = b_pad // tb

    if b_pad != B:
        pooled = jnp.pad(pooled, ((0, b_pad - B), (0, 0)))

    # Transposed bf16 operands for the MXU (cast + transpose fuse in XLA).
    x_t = pooled.astype(jnp.bfloat16).T                    # (H, B_pad)
    w1_t = w1.astype(jnp.bfloat16).T                       # (HID, H)
    b1_t = jnp.asarray(b1, jnp.float32).reshape(HID, 1)    # (HID, 1)
    w2_c = jnp.asarray(w2, jnp.float32).reshape(HID, 1)    # (HID, 1)
    b2_s = jnp.asarray(b2, jnp.float32).reshape(1, 1)      # (1, 1) scalar

    cost = pl.CostEstimate(
        flops=2 * b_pad * H * HID + 3 * b_pad * HID,
        transcendentals=2 * b_pad,                         # exp + approx recip
        bytes_accessed=(x_t.size * 2 + w1_t.size * 2
                        + (b1_t.size + w2_c.size + b2_s.size) * 4
                        + b_pad * 4),
    )

    out = pl.pallas_call(
        critic_head_kernel,
        out_shape=jax.ShapeDtypeStruct((1, b_pad), jnp.float32),
        grid=(nb,),
        in_specs=[
            pl.BlockSpec((H, tb), lambda i: (0, i)),            # x^T batch tile
            pl.BlockSpec((HID, H), lambda i: (0, 0)),           # W1^T, resident
            pl.BlockSpec((HID, 1), lambda i: (0, 0)),           # b1 column
            pl.BlockSpec((HID, 1), lambda i: (0, 0)),           # w2 column
            pl.BlockSpec(memory_space=pltpu.MemorySpace.SMEM),  # b2 scalar
        ],
        out_specs=pl.BlockSpec((1, tb), lambda i: (0, i)),      # lane-dense
        compiler_params=pltpu.CompilerParams(
            dimension_semantics=("parallel",),
        ),
        cost_estimate=cost,
    )(x_t, w1_t, b1_t, w2_c, b2_s)

    return out[0, :B].reshape(B, 1)


def reference_head(pooled, w1, b1, w2, b2):
    # Matches the kernel's bf16-GEMM / f32-elementwise numerics.
    h = jnp.dot(pooled.astype(jnp.bfloat16), w1.astype(jnp.bfloat16),
                preferred_element_type=jnp.float32)
    h = jnp.maximum(h + b1, 0.0)
    z = h @ w2 + b2
    return jax.nn.sigmoid(z)


if __name__ == "__main__":
    # Small synthetic shapes consistent with the module's forward:
    #   batch B=8, synthetic BERT pooled hidden size H=32, classifier hidden=128.
    B, H, HIDDEN_DIM = 8, 32, 128

    key = jax.random.PRNGKey(0)
    k_x, k_w1, k_b1, k_w2, k_b2 = jax.random.split(key, 5)

    # Deterministic stand-in for bert_encoder(...).pooler_output.
    pooled = jax.random.normal(k_x, (B, H), dtype=jnp.float32)

    # Classifier parameters: Linear(H, 128) -> ReLU -> Linear(128, 1) -> Sigmoid.
    w1 = jax.random.normal(k_w1, (H, HIDDEN_DIM), dtype=jnp.float32) * 0.05
    b1 = jax.random.normal(k_b1, (1, HIDDEN_DIM), dtype=jnp.float32) * 0.01
    w2 = jax.random.normal(k_w2, (HIDDEN_DIM, 1), dtype=jnp.float32) * 0.05
    b2 = jax.random.normal(k_b2, (1, 1), dtype=jnp.float32) * 0.01

    out = critic_head(pooled, w1, b1, w2, b2)
    out = jax.block_until_ready(out)

    ref = reference_head(pooled, w1, b1, w2, b2)
    assert out.shape == (B, 1)
    assert jnp.allclose(out, ref, atol=2e-3, rtol=2e-3), "mismatch vs reference"

    print("KERNEL_OK")
</pallas_src>

<mosaic_0001>
module attributes {stable_mosaic.version = 11 : i64} {
  func.func @critic_head_kernel(%arg0: i32, %arg1: memref<32x128xbf16, #tpu.memory_space<vmem>>, %arg2: memref<128x32xbf16, #tpu.memory_space<vmem>>, %arg3: memref<128x1xf32, #tpu.memory_space<vmem>>, %arg4: memref<128x1xf32, #tpu.memory_space<vmem>>, %arg5: memref<1x1xf32, #tpu.memory_space<smem>>, %arg6: memref<1x128xf32, #tpu.memory_space<vmem>>) attributes {dimension_semantics = [#tpu.dimension_semantics<parallel>], iteration_bounds = array<i64: 1>, scalar_prefetch = 0 : i64, scratch_operands = 0 : i64, tpu.core_type = #tpu.core_type<tc>, window_params = [{transform_indices = @transform_0, window_bounds = array<i64: 32, 128>}, {pipeline_mode = #tpu.pipeline_mode<synchronous>, transform_indices = @transform_1, window_bounds = array<i64: 128, 32>}, {pipeline_mode = #tpu.pipeline_mode<synchronous>, transform_indices = @transform_2, window_bounds = array<i64: 128, 1>}, {pipeline_mode = #tpu.pipeline_mode<synchronous>, transform_indices = @transform_3, window_bounds = array<i64: 128, 1>}, {transform_indices = @transform_4, window_bounds = array<i64: 1, 1>}, {transform_indices = @transform_5, window_bounds = array<i64: 1, 128>}]} {
    %c0 = arith.constant 0 : index
    %c0_0 = arith.constant 0 : index
    %0 = vector.load %arg2[%c0, %c0_0] : memref<128x32xbf16, #tpu.memory_space<vmem>>, vector<128x32xbf16>
    %c0_1 = arith.constant 0 : index
    %c0_2 = arith.constant 0 : index
    %1 = vector.load %arg1[%c0_1, %c0_2] : memref<32x128xbf16, #tpu.memory_space<vmem>>, vector<32x128xbf16>
    %cst = arith.constant dense<0.000000e+00> : vector<128x128xf32>
    %2 = tpu.matmul %0, %1, %cst {dimension_numbers = #tpu.dot_dimension_numbers<[1], [0], [0], [1], [0, 0, 1, 1], [], []>} : vector<128x32xbf16>, vector<32x128xbf16>, vector<128x128xf32> -> vector<128x128xf32>
    %c0_3 = arith.constant 0 : index
    %c0_4 = arith.constant 0 : index
    %3 = vector.load %arg3[%c0_3, %c0_4] : memref<128x1xf32, #tpu.memory_space<vmem>>, vector<128x1xf32>
    %4 = vector.broadcast %3 : vector<128x1xf32> to vector<128x128xf32>
    %5 = arith.addf %2, %4 : vector<128x128xf32>
    %cst_5 = arith.constant 0.000000e+00 : f32
    %6 = vector.broadcast %cst_5 : f32 to vector<128x128xf32>
    %7 = arith.maximumf %5, %6 : vector<128x128xf32>
    %c0_6 = arith.constant 0 : index
    %c0_7 = arith.constant 0 : index
    %8 = vector.load %arg4[%c0_6, %c0_7] : memref<128x1xf32, #tpu.memory_space<vmem>>, vector<128x1xf32>
    %9 = vector.broadcast %8 : vector<128x1xf32> to vector<128x128xf32>
    %10 = arith.mulf %7, %9 : vector<128x128xf32>
    %cst_8 = arith.constant dense<0.000000e+00> : vector<128xf32>
    %11 = vector.multi_reduction <add>, %10, %cst_8 [0] : vector<128x128xf32> to vector<128xf32>
    %12 = vector.shape_cast %11 : vector<128xf32> to vector<1x128xf32>
    %c0_9 = arith.constant 0 : index
    %c0_10 = arith.constant 0 : index
    %13 = memref.load %arg5[%c0_9, %c0_10] : memref<1x1xf32, #tpu.memory_space<smem>>
    %14 = vector.broadcast %13 : f32 to vector<1x128xf32>
    %15 = arith.addf %12, %14 : vector<1x128xf32>
    %cst_11 = arith.constant 0.000000e+00 : f32
    %16 = vector.broadcast %cst_11 : f32 to vector<1x128xf32>
    %17 = arith.subf %16, %15 : vector<1x128xf32>
    %18 = math.exp %17 : vector<1x128xf32>
    %cst_12 = arith.constant 1.000000e+00 : f32
    %19 = vector.broadcast %cst_12 : f32 to vector<1x128xf32>
    %20 = arith.addf %19, %18 : vector<1x128xf32>
    %21 = tpu.reciprocal %20 {approx = true} : vector<1x128xf32> -> vector<1x128xf32>
    %c0_13 = arith.constant 0 : index
    %c0_14 = arith.constant 0 : index
    %22 = vector.load %arg6[%c0_13, %c0_14] : memref<1x128xf32, #tpu.memory_space<vmem>>, vector<1x128xf32>
    tpu.vector_store %arg6[%c0_13, %c0_14], %21 {strides = array<i32>} : memref<1x128xf32, #tpu.memory_space<vmem>>, vector<1x128xf32>,
    return
  }
  func.func @transform_0(%arg0: i32) -> (i32, i32) {
    %c0_i32 = arith.constant 0 : i32
    %c0_i32_0 = arith.constant 0 : i32
    return %c0_i32, %arg0 : i32, i32
  }
  func.func @transform_1(%arg0: i32) -> (i32, i32) {
    %c0_i32 = arith.constant 0 : i32
    %c0_i32_0 = arith.constant 0 : i32
    %c0_i32_1 = arith.constant 0 : i32
    return %c0_i32, %c0_i32_0 : i32, i32
  }
  func.func @transform_2(%arg0: i32) -> (i32, i32) {
    %c0_i32 = arith.constant 0 : i32
    %c0_i32_0 = arith.constant 0 : i32
    %c0_i32_1 = arith.constant 0 : i32
    return %c0_i32, %c0_i32_0 : i32, i32
  }
  func.func @transform_3(%arg0: i32) -> (i32, i32) {
    %c0_i32 = arith.constant 0 : i32
    %c0_i32_0 = arith.constant 0 : i32
    %c0_i32_1 = arith.constant 0 : i32
    return %c0_i32, %c0_i32_0 : i32, i32
  }
  func.func @transform_4(%arg0: i32) -> (i32, i32) {
    %c0_i32 = arith.constant 0 : i32
    %c0_i32_0 = arith.constant 0 : i32
    %c0_i32_1 = arith.constant 0 : i32
    return %c0_i32, %c0_i32_0 : i32, i32
  }
  func.func @transform_5(%arg0: i32) -> (i32, i32) {
    %c0_i32 = arith.constant 0 : i32
    %c0_i32_0 = arith.constant 0 : i32
    return %c0_i32, %arg0 : i32, i32
  }
}

</mosaic_0001>

<llo_original>
// kernel: tpu_custom_call.1
$region0: #{tpu_custom_call.1}
  #allocation0 [shape = 'u32[]', space=smem, size = 0x4, offset = 0x4, fixed_abs, tag = 'smem constant byte address 0x4 - core index']
  #allocation1 [shape = 'u32[144,128]{1,0:T(1,128)}', space=vmem, size = 0x12000, scoped, tag = 'internal scratch']
  #allocation2 [shape = 'f32[1,1]{1,0:T(1,128)S(6)}', space=smem, size = 0x200, scoped, tag = 'scoped memory for tpu_custom_call.1']
  %s0 = inlined_call_operand.vmem [shape: bf16[32,128], index: 0, kind: input, shape index: {}]
  %s1 = inlined_call_operand.vmem [shape: bf16[128,32], index: 1, kind: input, shape index: {}]
  %s2 = inlined_call_operand.vmem [shape: f32[128,1], index: 2, kind: input, shape index: {}]
  %s3 = inlined_call_operand.vmem [shape: f32[128,1], index: 3, kind: input, shape index: {}]
  %s4 = inlined_call_operand.<no memory space> [shape: f32[1,1], index: 4, kind: input, shape index: {}]
  %s5 = inlined_call_operand.hbm [shape: f32[1,128], index: 5, kind: output, shape index: {}]
  %s6 = sld [smem:[#allocation0]]
  $region30: #{tpu_custom_call.1} parent=0
    _
  %s8 = ssub.s32 1, %s6
  %s9 = scalar_select 0, %s8, %s6
  %10 = sst [smem:[#allocation2]] %s4
  $region1: #{tpu_custom_call.1} parent=0
    #allocation3 [shape = 'u8[512]{0}', space=vmem, size = 0x400, scoped, tag = 'output window, operand 0, single buffered']
    #allocation4 [shape = 's32[1]{0}', space=sflag, size = 0x4, scoped, tag = 'scoped memory for tpu_custom_call.1']
    %11 = vsyncpa [#allocation4], 0
    // Predicated region
    $region2: #{tpu_custom_call.1} parent=1 // pred_check
      _
    $region3: #{tpu_custom_call.1} parent=1 // pred_check_branch
      %13 = sbr.rel (0) target = $region5
    $region4: #{tpu_custom_call.1} parent=1 // pred_region
      _
    $region5: #{tpu_custom_call.1} parent=1 // pred_fallthru
      _
    // Predicated region
    $region6: #{tpu_custom_call.1} parent=1 // pred_check
      _
    $region7: #{tpu_custom_call.1} parent=1 // pred_check_branch
      %15 = sbr.rel (0) target = $region9
    $region8: #{tpu_custom_call.1} parent=1 // pred_region
      _
    $region9: #{tpu_custom_call.1} parent=1 // pred_fallthru
      _
    // Predicated region
    $region10: #{tpu_custom_call.1} parent=1 // pred_check
      _
    $region11: #{tpu_custom_call.1} parent=1 // pred_check_branch
      %17 = sbr.rel (0) target = $region13
    $region12: #{tpu_custom_call.1} parent=1 // pred_region
      _
    $region13: #{tpu_custom_call.1} parent=1 // pred_fallthru
      _
    // Predicated region
    $region14: #{tpu_custom_call.1} parent=1 // pred_check
      _
    $region15: #{tpu_custom_call.1} parent=1 // pred_check_branch
      %19 = sbr.rel (0) target = $region17
    $region16: #{tpu_custom_call.1} parent=1 // pred_region
      _
    $region17: #{tpu_custom_call.1} parent=1 // pred_fallthru
      _
    // Predicated region
    $region18: #{tpu_custom_call.1} parent=1 // pred_check
      _
    $region19: #{tpu_custom_call.1} parent=1 // pred_check_branch
      %21 = sbr.rel (0) target = $region21
    $region20: #{tpu_custom_call.1} parent=1 // pred_region
      _
    $region21: #{tpu_custom_call.1} parent=1 // pred_fallthru
      _
    %v23 = vld [vmem:[%s1] sm:$0xf]
    %v24 = vld [vmem:[%s1 + $0x4] sm:$0xf]
    %v25 = vld [vmem:[%s1 + $0x8] sm:$0xf]
    %v26 = vld [vmem:[%s1 + $0xc] sm:$0xf]
    %v27 = vld [vmem:[%s1 + $0x10] sm:$0xf]
    %v28 = vld [vmem:[%s1 + $0x14] sm:$0xf]
    %v29 = vld [vmem:[%s1 + $0x18] sm:$0xf]
    %v30 = vld [vmem:[%s1 + $0x1c] sm:$0xf]
    %v31 = vld [vmem:[%s1 + $0x20] sm:$0xf]
    %v32 = vld [vmem:[%s1 + $0x24] sm:$0xf]
    %v33 = vld [vmem:[%s1 + $0x28] sm:$0xf]
    %v34 = vld [vmem:[%s1 + $0x2c] sm:$0xf]
    %v35 = vld [vmem:[%s1 + $0x30] sm:$0xf]
    %v36 = vld [vmem:[%s1 + $0x34] sm:$0xf]
    %v37 = vld [vmem:[%s1 + $0x38] sm:$0xf]
    %v38 = vld [vmem:[%s1 + $0x3c] sm:$0xf]
    %v39 = vld [vmem:[%s0] sm:$0xf]
    %v40 = vld [vmem:[%s0 + $0x4] sm:$0xf]
    %v41 = vld [vmem:[%s0 + $0x8] sm:$0xf]
    %v42 = vld [vmem:[%s0 + $0xc] sm:$0xf]
    %v43 = vld [vmem:[%s2] sm:$0xff]
    %v44 = vld [vmem:[%s2 + $0x8] sm:$0xff]
    %v45 = vld [vmem:[%s2 + $0x10] sm:$0xff]
    %v46 = vld [vmem:[%s2 + $0x18] sm:$0xff]
    %v47 = vld [vmem:[%s2 + $0x20] sm:$0xff]
    %v48 = vld [vmem:[%s2 + $0x28] sm:$0xff]
    %v49 = vld [vmem:[%s2 + $0x30] sm:$0xff]
    %v50 = vld [vmem:[%s2 + $0x38] sm:$0xff]
    %v51 = vld [vmem:[%s2 + $0x40] sm:$0xff]
    %v52 = vld [vmem:[%s2 + $0x48] sm:$0xff]
    %v53 = vld [vmem:[%s2 + $0x50] sm:$0xff]
    %v54 = vld [vmem:[%s2 + $0x58] sm:$0xff]
    %v55 = vld [vmem:[%s2 + $0x60] sm:$0xff]
    %v56 = vld [vmem:[%s2 + $0x68] sm:$0xff]
    %v57 = vld [vmem:[%s2 + $0x70] sm:$0xff]
    %v58 = vld [vmem:[%s2 + $0x78] sm:$0xff]
    %60 = vset.pattern.permute.xlu0 0
    %61 = vperm.xlu0 %60, %v43
    %v62 = vpop.permute.xlu0 %61
    %65 = vset.pattern.permute.xlu0 0
    %66 = vperm.xlu0 %65, %v44
    %v67 = vpop.permute.xlu0 %66
    %70 = vset.pattern.permute.xlu0 0
    %71 = vperm.xlu0 %70, %v45
    %v72 = vpop.permute.xlu0 %71
    %75 = vset.pattern.permute.xlu0 0
    %76 = vperm.xlu0 %75, %v46
    %v77 = vpop.permute.xlu0 %76
    %80 = vset.pattern.permute.xlu0 0
    %81 = vperm.xlu0 %80, %v47
    %v82 = vpop.permute.xlu0 %81
    %85 = vset.pattern.permute.xlu0 0
    %86 = vperm.xlu0 %85, %v48
    %v87 = vpop.permute.xlu0 %86
    %90 = vset.pattern.permute.xlu0 0
    %91 = vperm.xlu0 %90, %v49
    %v92 = vpop.permute.xlu0 %91
    %95 = vset.pattern.permute.xlu0 0
    %96 = vperm.xlu0 %95, %v50
    %v97 = vpop.permute.xlu0 %96
    %100 = vset.pattern.permute.xlu0 0
    %101 = vperm.xlu0 %100, %v51
    %v102 = vpop.permute.xlu0 %101
    %105 = vset.pattern.permute.xlu0 0
    %106 = vperm.xlu0 %105, %v52
    %v107 = vpop.permute.xlu0 %106
    %110 = vset.pattern.permute.xlu0 0
    %111 = vperm.xlu0 %110, %v53
    %v112 = vpop.permute.xlu0 %111
    %115 = vset.pattern.permute.xlu0 0
    %116 = vperm.xlu0 %115, %v54
    %v117 = vpop.permute.xlu0 %116
    %120 = vset.pattern.permute.xlu0 0
    %121 = vperm.xlu0 %120, %v55
    %v122 = vpop.permute.xlu0 %121
    %125 = vset.pattern.permute.xlu0 0
    %126 = vperm.xlu0 %125, %v56
    %v127 = vpop.permute.xlu0 %126
    %130 = vset.pattern.permute.xlu0 0
    %131 = vperm.xlu0 %130, %v57
    %v132 = vpop.permute.xlu0 %131
    %135 = vset.pattern.permute.xlu0 0
    %136 = vperm.xlu0 %135, %v58
    %v137 = vpop.permute.xlu0 %136
    %v155 = vunpack.c.l.b16 %v23
    %v156 = vunpack.c.l.b16 %v24
    %v157 = vunpack.c.l.b16 %v25
    %v158 = vunpack.c.l.b16 %v26
    %v159 = vunpack.c.l.b16 %v27
    %v160 = vunpack.c.l.b16 %v28
    %v161 = vunpack.c.l.b16 %v29
    %v162 = vunpack.c.l.b16 %v30
    %v163 = vunpack.c.l.b16 %v31
    %v164 = vunpack.c.l.b16 %v32
    %v165 = vunpack.c.l.b16 %v33
    %v166 = vunpack.c.l.b16 %v34
    %v167 = vunpack.c.l.b16 %v35
    %v168 = vunpack.c.l.b16 %v36
    %v169 = vunpack.c.l.b16 %v37
    %v170 = vunpack.c.l.b16 %v38
    %v171 = vpack.c.b16 %v156, %v155
    %v172 = vpack.c.b16 %v158, %v157
    %v173 = vpack.c.b16 %v160, %v159
    %v174 = vpack.c.b16 %v162, %v161
    %v175 = vpack.c.b16 %v164, %v163
    %v176 = vpack.c.b16 %v166, %v165
    %v177 = vpack.c.b16 %v168, %v167
    %v178 = vpack.c.b16 %v170, %v169
    %v183 = vunpack.c.l.b16 %v39
    %v184 = vunpack.c.l.b16 %v40
    %v185 = vunpack.c.l.b16 %v41
    %v186 = vunpack.c.l.b16 %v42
    %v187 = vpack.c.b16 %v184, %v183
    %v188 = vpack.c.b16 %v186, %v185
    %vm191 = vcmask 261120
    %v193 = vsel %vm191, %v171, 0
    %v196 = vsel %vm191, %v172, 0
    %v199 = vsel %vm191, %v173, 0
    %v202 = vsel %vm191, %v174, 0
    %v205 = vsel %vm191, %v175, 0
    %v208 = vsel %vm191, %v176, 0
    %v211 = vsel %vm191, %v177, 0
    %v214 = vsel %vm191, %v178, 0
    %216 = vmatprep.subr.bf16.mxu0 0
    %217 = vmatpush1.bf16.msra.mxu0 %v187
    %218 = vmatprep.subr.bf16.mxu0 0
    %219 = vmatpush1.bf16.msra.mxu0 %v188
    %220 = vmatprep.subr.bf16.mxu0 0
    %221 = vmatpush1.bf16.msra.mxu0 0
    %222 = vmatprep.subr.bf16.mxu0 0
    %223 = vmatpush1.bf16.msra.mxu0 0
    %224 = vmatprep.subr.bf16.mxu0 0
    %225 = vmatpush1.bf16.msra.mxu0 0
    %226 = vmatprep.subr.bf16.mxu0 0
    %227 = vmatpush1.bf16.msra.mxu0 0
    %228 = vmatprep.subr.bf16.mxu0 0
    %229 = vmatpush1.bf16.msra.mxu0 0
    %230 = vmatprep.subr.bf16.mxu0 0
    %231 = vmatpush1.bf16.msra.mxu0 0
    %232 = vmatprep.subr.bf16.mxu0 0
    %233 = vmatpush1.bf16.msra.mxu0 0
    %234 = vmatprep.subr.bf16.mxu0 0
    %235 = vmatpush1.bf16.msra.mxu0 0
    %236 = vmatprep.subr.bf16.mxu0 0
    %237 = vmatpush1.bf16.msra.mxu0 0
    %238 = vmatprep.subr.bf16.mxu0 0
    %239 = vmatpush1.bf16.msra.mxu0 0
    %240 = vmatprep.subr.bf16.mxu0 0
    %241 = vmatpush1.bf16.msra.mxu0 0
    %242 = vmatprep.subr.bf16.mxu0 0
    %243 = vmatpush1.bf16.msra.mxu0 0
    %244 = vmatprep.subr.bf16.mxu0 0
    %245 = vmatpush1.bf16.msra.mxu0 0
    %246 = vmatprep.subr.bf16.mxu0 0
    %247 = vmatpush1.bf16.msra.mxu0 0
    %248 = vmatprep.mubr.bf16.mxu0 0
    %249 = vmatmul.mubr.bf16.gmra.mrb[0].mxu0 %v193
    %v250 = vpop.f32.mrb[0].mxu0
    %v251 = vadd.f32 %v62, %v250
    %v252 = vpop.f32.mrb[0].mxu0
    %v253 = vpop.f32.mrb[0].mxu0
    %v254 = vadd.f32 %v67, %v253
    %v255 = vpop.f32.mrb[0].mxu0
    %256 = vmatprep.mubr.bf16.mxu0 0
    %257 = vmatmul.mubr.bf16.gmra.mrb[0].mxu0 %v196
    %v258 = vpop.f32.mrb[0].mxu0
    %v259 = vadd.f32 %v72, %v258
    %v260 = vpop.f32.mrb[0].mxu0
    %v261 = vpop.f32.mrb[0].mxu0
    %v262 = vadd.f32 %v77, %v261
    %v263 = vpop.f32.mrb[0].mxu0
    %264 = vmatprep.mubr.bf16.mxu0 0
    %265 = vmatmul.mubr.bf16.gmra.mrb[0].mxu0 %v199
    %v266 = vpop.f32.mrb[0].mxu0
    %v267 = vadd.f32 %v82, %v266
    %v268 = vpop.f32.mrb[0].mxu0
    %v269 = vpop.f32.mrb[0].mxu0
    %v270 = vadd.f32 %v87, %v269
    %v271 = vpop.f32.mrb[0].mxu0
    %272 = vmatprep.mubr.bf16.mxu0 0
    %273 = vmatmul.mubr.bf16.gmra.mrb[0].mxu0 %v202
    %v274 = vpop.f32.mrb[0].mxu0
    %v275 = vadd.f32 %v92, %v274
    %v276 = vpop.f32.mrb[0].mxu0
    %v277 = vpop.f32.mrb[0].mxu0
    %v278 = vadd.f32 %v97, %v277
    %v279 = vpop.f32.mrb[0].mxu0
    %280 = vmatprep.mubr.bf16.mxu0 0
    %281 = vmatmul.mubr.bf16.gmra.mrb[0].mxu0 %v205
    %v282 = vpop.f32.mrb[0].mxu0
    %v283 = vadd.f32 %v102, %v282
    %v284 = vpop.f32.mrb[0].mxu0
    %v285 = vpop.f32.mrb[0].mxu0
    %v286 = vadd.f32 %v107, %v285
    %v287 = vpop.f32.mrb[0].mxu0
    %288 = vmatprep.mubr.bf16.mxu0 0
    %289 = vmatmul.mubr.bf16.gmra.mrb[0].mxu0 %v208
    %v290 = vpop.f32.mrb[0].mxu0
    %v291 = vadd.f32 %v112, %v290
    %v292 = vpop.f32.mrb[0].mxu0
    %v293 = vpop.f32.mrb[0].mxu0
    %v294 = vadd.f32 %v117, %v293
    %v295 = vpop.f32.mrb[0].mxu0
    %296 = vmatprep.mubr.bf16.mxu0 0
    %297 = vmatmul.mubr.bf16.gmra.mrb[0].mxu0 %v211
    %v298 = vpop.f32.mrb[0].mxu0
    %v299 = vadd.f32 %v122, %v298
    %v300 = vpop.f32.mrb[0].mxu0
    %v301 = vpop.f32.mrb[0].mxu0
    %v302 = vadd.f32 %v127, %v301
    %v303 = vpop.f32.mrb[0].mxu0
    %304 = vmatprep.mubr.bf16.mxu0 0
    %305 = vmatmul.mubr.bf16.gmra.mrb[0].mxu0 %v214
    %v306 = vpop.f32.mrb[0].mxu0
    %v307 = vadd.f32 %v132, %v306
    %v308 = vpop.f32.mrb[0].mxu0
    %v309 = vpop.f32.mrb[0].mxu0
    %v310 = vadd.f32 %v137, %v309
    %v311 = vpop.f32.mrb[0].mxu0
    %312 = vdwg.mxu0
    %v313 = vmax.f32 %v251, 0.0
    %v314 = vmax.f32 %v254, 0.0
    %v315 = vmax.f32 %v259, 0.0
    %v316 = vmax.f32 %v262, 0.0
    %v317 = vmax.f32 %v267, 0.0
    %v318 = vmax.f32 %v270, 0.0
    %v319 = vmax.f32 %v275, 0.0
    %v320 = vmax.f32 %v278, 0.0
    %v321 = vmax.f32 %v283, 0.0
    %v322 = vmax.f32 %v286, 0.0
    %v323 = vmax.f32 %v291, 0.0
    %v324 = vmax.f32 %v294, 0.0
    %v325 = vmax.f32 %v299, 0.0
    %v326 = vmax.f32 %v302, 0.0
    %v327 = vmax.f32 %v307, 0.0
    %v328 = vmax.f32 %v310, 0.0
    %v329 = vld [vmem:[%s3] sm:$0xff]
    %v330 = vld [vmem:[%s3 + $0x8] sm:$0xff]
    %v331 = vld [vmem:[%s3 + $0x10] sm:$0xff]
    %v332 = vld [vmem:[%s3 + $0x18] sm:$0xff]
    %v333 = vld [vmem:[%s3 + $0x20] sm:$0xff]
    %v334 = vld [vmem:[%s3 + $0x28] sm:$0xff]
    %v335 = vld [vmem:[%s3 + $0x30] sm:$0xff]
    %v336 = vld [vmem:[%s3 + $0x38] sm:$0xff]
    %v337 = vld [vmem:[%s3 + $0x40] sm:$0xff]
    %v338 = vld [vmem:[%s3 + $0x48] sm:$0xff]
    %v339 = vld [vmem:[%s3 + $0x50] sm:$0xff]
    %v340 = vld [vmem:[%s3 + $0x58] sm:$0xff]
    %v341 = vld [vmem:[%s3 + $0x60] sm:$0xff]
    %v342 = vld [vmem:[%s3 + $0x68] sm:$0xff]
    %v343 = vld [vmem:[%s3 + $0x70] sm:$0xff]
    %v344 = vld [vmem:[%s3 + $0x78] sm:$0xff]
    %346 = vset.pattern.permute.xlu0 0
    %347 = vperm.xlu0 %346, %v329
    %v348 = vpop.permute.xlu0 %347
    %351 = vset.pattern.permute.xlu0 0
    %352 = vperm.xlu0 %351, %v330
    %v353 = vpop.permute.xlu0 %352
    %356 = vset.pattern.permute.xlu0 0
    %357 = vperm.xlu0 %356, %v331
    %v358 = vpop.permute.xlu0 %357
    %361 = vset.pattern.permute.xlu0 0
    %362 = vperm.xlu0 %361, %v332
    %v363 = vpop.permute.xlu0 %362
    %366 = vset.pattern.permute.xlu0 0
    %367 = vperm.xlu0 %366, %v333
    %v368 = vpop.permute.xlu0 %367
    %371 = vset.pattern.permute.xlu0 0
    %372 = vperm.xlu0 %371, %v334
    %v373 = vpop.permute.xlu0 %372
    %376 = vset.pattern.permute.xlu0 0
    %377 = vperm.xlu0 %376, %v335
    %v378 = vpop.permute.xlu0 %377
    %381 = vset.pattern.permute.xlu0 0
    %382 = vperm.xlu0 %381, %v336
    %v383 = vpop.permute.xlu0 %382
    %386 = vset.pattern.permute.xlu0 0
    %387 = vperm.xlu0 %386, %v337
    %v388 = vpop.permute.xlu0 %387
    %391 = vset.pattern.permute.xlu0 0
    %392 = vperm.xlu0 %391, %v338
    %v393 = vpop.permute.xlu0 %392
    %396 = vset.pattern.permute.xlu0 0
    %397 = vperm.xlu0 %396, %v339
    %v398 = vpop.permute.xlu0 %397
    %401 = vset.pattern.permute.xlu0 0
    %402 = vperm.xlu0 %401, %v340
    %v403 = vpop.permute.xlu0 %402
    %406 = vset.pattern.permute.xlu0 0
    %407 = vperm.xlu0 %406, %v341
    %v408 = vpop.permute.xlu0 %407
    %411 = vset.pattern.permute.xlu0 0
    %412 = vperm.xlu0 %411, %v342
    %v413 = vpop.permute.xlu0 %412
    %416 = vset.pattern.permute.xlu0 0
    %417 = vperm.xlu0 %416, %v343
    %v418 = vpop.permute.xlu0 %417
    %421 = vset.pattern.permute.xlu0 0
    %422 = vperm.xlu0 %421, %v344
    %v423 = vpop.permute.xlu0 %422
    %v425 = vmul.f32 %v313, %v348
    %v426 = vmul.f32 %v314, %v353
    %v427 = vmul.f32 %v315, %v358
    %v428 = vmul.f32 %v316, %v363
    %v429 = vmul.f32 %v317, %v368
    %v430 = vmul.f32 %v318, %v373
    %v431 = vmul.f32 %v319, %v378
    %v432 = vmul.f32 %v320, %v383
    %v433 = vmul.f32 %v321, %v388
    %v434 = vmul.f32 %v322, %v393
    %v435 = vmul.f32 %v323, %v398
    %v436 = vmul.f32 %v324, %v403
    %v437 = vmul.f32 %v325, %v408
    %v438 = vmul.f32 %v326, %v413
    %v439 = vmul.f32 %v327, %v418
    %v440 = vmul.f32 %v328, %v423
    %v441 = vadd.f32 %v425, %v426
    %v442 = vadd.f32 %v441, %v427
    %v443 = vadd.f32 %v442, %v428
    %v444 = vadd.f32 %v443, %v429
    %v445 = vadd.f32 %v444, %v430
    %v446 = vadd.f32 %v445, %v431
    %v447 = vadd.f32 %v446, %v432
    %v448 = vadd.f32 %v447, %v433
    %v449 = vadd.f32 %v448, %v434
    %v450 = vadd.f32 %v449, %v435
    %v451 = vadd.f32 %v450, %v436
    %v452 = vadd.f32 %v451, %v437
    %v453 = vadd.f32 %v452, %v438
    %v454 = vadd.f32 %v453, %v439
    %v455 = vadd.f32 %v454, %v440
    %v456 = vrot.slane %v455, 4
    %v457 = vadd.f32 %v455, %v456
    %v458 = vrot.slane %v457, 2
    %v459 = vadd.f32 %v457, %v458
    %v460 = vrot.slane %v459, 1
    %v461 = vadd.f32 %v459, %v460
    %s462 = sld [smem:[#allocation2]]
    %v463 = vstv %s462
    %v464 = vadd.f32 %v461, %v463
    %v465 = vsub.f32 0.0, %v464
    %v466 = vmul.f32 %v465, 1.442695
    %v467 = vpow.pop %v466
    %v468 = vadd.f32 %v467, 1.0
    %v469 = vrcp.pop %v468
    %470 = vst [vmem:[#allocation3] sm:$0x1] %v469
    // Predicated region
    $region22: #{tpu_custom_call.1} parent=1 // pred_check
      _
    $region23: #{tpu_custom_call.1} parent=1 // pred_check_branch
      %472 = sbr.rel (0) target = $region25
    $region24: #{tpu_custom_call.1} parent=1 // pred_region
      %s474 = ssub.s32 16, 16
      %475 = vsyncadd [#allocation4], %s474
      %s477 = sshll.u32 [#allocation3], 4
      %s478 = int_to_ptr.vmem [resolvable:$true] %s477
      %480 = dma.vmem_to_hbm [thread:$0]  %s478, 16, %s5, [#allocation4]
    $region25: #{tpu_custom_call.1} parent=1 // pred_fallthru
      _
    // Predicated region
    $region26: #{tpu_custom_call.1} parent=1 // pred_check
      _
    $region27: #{tpu_custom_call.1} parent=1 // pred_check_branch
      %482 = sbr.rel (0) target = $region29
    $region28: #{tpu_custom_call.1} parent=1 // pred_region
      %483 = dma.done [#allocation4], 16
    $region29: #{tpu_custom_call.1} parent=1 // pred_fallthru
      _
    %484 = vsyncpa [#allocation4], 1

</llo_original>
